<compile_context>
chip_gen: v7x
topology: tpu7x:2x2x1
jax: 0.10.0
libtpu: 0.0.40
codegen_flags: <defaults>
</compile_context>

<pallas_src>
import functools
import math

import jax
import jax.numpy as jnp
from jax.experimental import pallas as pl
from jax.experimental.pallas import tpu as pltpu


_INV_SQRT2 = 0.7071067811865476


def adapter_kernel(x_ref, wd_ref, bd_ref, wu_ref, bu_ref, o_ref):
    """Fused: out = x + (gelu(x @ Wd + bd) @ Wu + bu) for one (TM, D) tile."""
    x = x_ref[...]                                                      # [TM, D] native dtype

    # Down projection: native-dtype MXU matmul, f32 accumulation.
    h = jnp.dot(x, wd_ref[...], preferred_element_type=jnp.float32)    # [TM, Hp] f32
    h = h + bd_ref[...].astype(jnp.float32)

    # Exact GELU (PyTorch nn.GELU() default): 0.5*x*(1+erf(x/sqrt(2))).
    h = 0.5 * h * (1.0 + jax.lax.erf(h * _INV_SQRT2))

    # Up projection (intermediate cast back to the weight dtype for the MXU).
    u = jnp.dot(h.astype(wu_ref.dtype), wu_ref[...],
                preferred_element_type=jnp.float32)                    # [TM, D] f32
    u = u + bu_ref[...].astype(jnp.float32)

    # Residual add in f32, store in output dtype.
    o_ref[...] = (x.astype(jnp.float32) + u).astype(o_ref.dtype)


def _round_up(v, m):
    return ((v + m - 1) // m) * m


def _vmem_capacity_bytes():
    """Physical per-core VMEM; conservative (v7x-sized) fallback if unavailable."""
    try:
        return int(pltpu.get_tpu_info().vmem_capacity_bytes)
    except Exception:
        return 64 * 1024 * 1024


def _pick_tile_and_limit(M, D, Hp, itemsize, max_tile_m):
    """Choose (TM, vmem_limit_bytes) from the per-generation VMEM capacity."""
    cap = _vmem_capacity_bytes()
    # 48 MiB on v7x (64 MiB/TC), 96 MiB on v5e/v6e (128 MiB).
    vmem_limit = min(96 * 1024 * 1024, (3 * cap) // 4)

    # Resident weights/biases: the Pallas pipeline allocates 2 buffers per input by
    # default, even for block-invariant operands.
    weight_bytes = 2 * (D * Hp + Hp + Hp * D + D) * itemsize

    # Per-row VMEM cost:
    #   streamed x + out tiles, double-buffered:          2*(D + D)*itemsize
    #   in-kernel f32 h [TM, Hp] + its native-dtype cast:  Hp*(4 + itemsize)
    #   in-kernel f32 u / f32 residual copy [TM, D]:       2*D*4
    per_row = 4 * D * itemsize + Hp * (4 + itemsize) + 8 * D

    slack = 2 * 1024 * 1024
    budget = max(vmem_limit - weight_bytes - slack, 1 * 1024 * 1024)

    tm = budget // per_row
    tm = max(8, min(int(max_tile_m), int(tm)))
    tm = (tm // 8) * 8                       # sublane alignment
    tm = min(tm, _round_up(M, 8))            # don't exceed M (rounded to sublane)
    return max(8, tm), int(vmem_limit)


def pad_adapter_params(w_down, b_down, w_up):
    """Zero-pad the bottleneck dim to a multiple of 128 (numerically exact; call once)."""
    H = w_down.shape[1]
    Hp = _round_up(H, 128)
    if Hp != H:
        w_down = jnp.pad(w_down, ((0, 0), (0, Hp - H)))
        b_down = jnp.pad(b_down, ((0, 0), (0, Hp - H)))
        w_up = jnp.pad(w_up, ((0, Hp - H), (0, 0)))
    return w_down, b_down, w_up


@functools.partial(jax.jit, static_argnames=("max_tile_m",))
def adapter_forward(x, w_down, b_down, w_up, b_up, *, max_tile_m=1024):
    """x: [..., D] -> [..., D]. Flattens leading dims, runs the fused Pallas kernel."""
    orig_shape = x.shape
    D = orig_shape[-1]

    # Fallback only: prefer pre-padded params (pad_adapter_params) to keep this off the
    # per-call critical path.
    if w_down.shape[1] % 128 != 0:
        w_down, b_down, w_up = pad_adapter_params(w_down, b_down, w_up)
    Hp = w_down.shape[1]

    x2d = x.reshape(-1, D)
    M = x2d.shape[0]
    itemsize = jnp.dtype(x.dtype).itemsize

    tm, vmem_limit = _pick_tile_and_limit(M, D, Hp, itemsize, max_tile_m)
    grid = (pl.cdiv(M, tm),)                 # partial last block handled by Pallas masking

    cost = pl.CostEstimate(
        flops=4 * M * D * Hp,                                    # two matmuls
        transcendentals=M * Hp,                                  # erf per element
        bytes_accessed=(2 * M * D + 2 * Hp * D + Hp + D) * itemsize,
    )

    out = pl.pallas_call(
        adapter_kernel,
        out_shape=jax.ShapeDtypeStruct((M, D), x.dtype),
        grid=grid,
        in_specs=[
            pl.BlockSpec((tm, D), lambda i: (i, 0)),    # x       (streamed / double-buffered)
            pl.BlockSpec((D, Hp), lambda i: (0, 0)),    # w_down  (VMEM-resident)
            pl.BlockSpec((1, Hp), lambda i: (0, 0)),    # b_down  (VMEM-resident)
            pl.BlockSpec((Hp, D), lambda i: (0, 0)),    # w_up    (VMEM-resident)
            pl.BlockSpec((1, D), lambda i: (0, 0)),     # b_up    (VMEM-resident)
        ],
        out_specs=pl.BlockSpec((tm, D), lambda i: (i, 0)),
        compiler_params=pltpu.CompilerParams(
            dimension_semantics=("parallel",),
            vmem_limit_bytes=vmem_limit,
        ),
        cost_estimate=cost,
    )(x2d, w_down, b_down, w_up, b_up)

    return out.reshape(orig_shape)


def init_adapter_params(key, input_dim, bottleneck_dim, dtype=jnp.float32):
    """Deterministic init mirroring the PyTorch module's __init__.

    down.weight: kaiming_uniform_(a=sqrt(5)) -> U(-bound, bound), bound = sqrt(1/fan_in)
    down.bias, up.weight, up.bias: zeros.
    Stored transposed relative to torch ([in, out] instead of [out, in]).
    """
    fan_in = input_dim
    gain = math.sqrt(2.0 / (1.0 + 5.0))          # a = sqrt(5)
    bound = gain * math.sqrt(3.0 / fan_in)       # == sqrt(1 / fan_in)
    w_down = jax.random.uniform(
        key, (input_dim, bottleneck_dim), dtype=dtype, minval=-bound, maxval=bound)
    b_down = jnp.zeros((1, bottleneck_dim), dtype=dtype)
    w_up = jnp.zeros((bottleneck_dim, input_dim), dtype=dtype)
    b_up = jnp.zeros((1, input_dim), dtype=dtype)
    return w_down, b_down, w_up, b_up


def adapter_reference(x, w_down, b_down, w_up, b_up):
    h = x @ w_down + b_down[0]
    h = 0.5 * h * (1.0 + jax.lax.erf(h / jnp.sqrt(2.0)))
    return x + (h @ w_up + b_up[0])


if __name__ == "__main__":
    # Small shapes: batch=2, seq=8, input_dim=32, bottleneck_dim=16.
    B, S, D, H = 2, 8, 32, 16
    key = jax.random.PRNGKey(0)
    k_x, k_w, k_wu = jax.random.split(key, 3)

    x = jax.random.normal(k_x, (B, S, D), dtype=jnp.float32)
    w_down, b_down, w_up, b_up = init_adapter_params(k_w, D, H)

    # Pre-pad the bottleneck dim once (kept outside the jitted forward).
    w_down_p, b_down_p, w_up_p = pad_adapter_params(w_down, b_down, w_up)

    # f32 path; with zero-initialized up-projection the adapter is an identity at init.
    out = adapter_forward(x, w_down_p, b_down_p, w_up_p, b_up)
    jax.block_until_ready(out)
    ref = adapter_reference(x, w_down, b_down, w_up, b_up)
    assert jnp.allclose(out, ref, atol=1e-5, rtol=1e-5)
    assert jnp.allclose(out, x, atol=1e-6)

    # Non-trivial path: non-zero up-projection weights.
    w_up_nz = 0.02 * jax.random.normal(k_wu, (H, D), dtype=jnp.float32)
    b_up_nz = 0.01 * jnp.ones((1, D), dtype=jnp.float32)
    w_down_p2, b_down_p2, w_up_nz_p = pad_adapter_params(w_down, b_down, w_up_nz)
    out2 = adapter_forward(x, w_down_p2, b_down_p2, w_up_nz_p, b_up_nz)
    jax.block_until_ready(out2)
    ref2 = adapter_reference(x, w_down, b_down, w_up_nz, b_up_nz)
    assert jnp.allclose(out2, ref2, atol=1e-5, rtol=1e-5)

    # Ragged M (exercises the partial edge-block path: M=13 not a multiple of TM).
    x_rag = jax.random.normal(k_x, (13, D), dtype=jnp.float32)
    out3 = adapter_forward(x_rag, w_down_p2, b_down_p2, w_up_nz_p, b_up_nz)
    jax.block_until_ready(out3)
    ref3 = adapter_reference(x_rag, w_down, b_down, w_up_nz, b_up_nz)
    assert jnp.allclose(out3, ref3, atol=1e-5, rtol=1e-5)

    # Un-padded params fallback path (forward pads internally).
    out3b = adapter_forward(x_rag, w_down, b_down, w_up_nz, b_up_nz)
    jax.block_until_ready(out3b)
    assert jnp.allclose(out3b, ref3, atol=1e-5, rtol=1e-5)

    # bf16-at-HBM-boundary path (f32 accumulation in-kernel); loose tolerance vs f32 ref.
    outb = adapter_forward(
        x.astype(jnp.bfloat16),
        w_down_p2.astype(jnp.bfloat16), b_down_p2.astype(jnp.bfloat16),
        w_up_nz_p.astype(jnp.bfloat16), b_up_nz.astype(jnp.bfloat16))
    jax.block_until_ready(outb)
    assert jnp.allclose(outb.astype(jnp.float32), ref2, atol=5e-2, rtol=5e-2)

    print("KERNEL_OK")
</pallas_src>

<mosaic_0001>
module attributes {stable_mosaic.version = 11 : i64} {
  func.func @adapter_kernel(%arg0: i32, %arg1: memref<16x32xf32, #tpu.memory_space<vmem>>, %arg2: memref<32x128xf32, #tpu.memory_space<vmem>>, %arg3: memref<1x128xf32, #tpu.memory_space<vmem>>, %arg4: memref<128x32xf32, #tpu.memory_space<vmem>>, %arg5: memref<1x32xf32, #tpu.memory_space<vmem>>, %arg6: memref<16x32xf32, #tpu.memory_space<vmem>>) attributes {dimension_semantics = [#tpu.dimension_semantics<parallel>], iteration_bounds = array<i64: 1>, scalar_prefetch = 0 : i64, scratch_operands = 0 : i64, tpu.core_type = #tpu.core_type<tc>, window_params = [{transform_indices = @transform_0, window_bounds = array<i64: 16, 32>}, {pipeline_mode = #tpu.pipeline_mode<synchronous>, transform_indices = @transform_1, window_bounds = array<i64: 32, 128>}, {pipeline_mode = #tpu.pipeline_mode<synchronous>, transform_indices = @transform_2, window_bounds = array<i64: 1, 128>}, {pipeline_mode = #tpu.pipeline_mode<synchronous>, transform_indices = @transform_3, window_bounds = array<i64: 128, 32>}, {pipeline_mode = #tpu.pipeline_mode<synchronous>, transform_indices = @transform_4, window_bounds = array<i64: 1, 32>}, {transform_indices = @transform_5, window_bounds = array<i64: 16, 32>}]} {
    %c0 = arith.constant 0 : index
    %c0_0 = arith.constant 0 : index
    %0 = vector.load %arg1[%c0, %c0_0] : memref<16x32xf32, #tpu.memory_space<vmem>>, vector<16x32xf32>
    %c0_1 = arith.constant 0 : index
    %c0_2 = arith.constant 0 : index
    %1 = vector.load %arg2[%c0_1, %c0_2] : memref<32x128xf32, #tpu.memory_space<vmem>>, vector<32x128xf32>
    %cst = arith.constant dense<0.000000e+00> : vector<16x128xf32>
    %2 = tpu.matmul %0, %1, %cst {dimension_numbers = #tpu.dot_dimension_numbers<[1], [0], [0], [1], [0, 0, 1, 1], [], []>} : vector<16x32xf32>, vector<32x128xf32>, vector<16x128xf32> -> vector<16x128xf32>
    %c0_3 = arith.constant 0 : index
    %c0_4 = arith.constant 0 : index
    %3 = vector.load %arg3[%c0_3, %c0_4] : memref<1x128xf32, #tpu.memory_space<vmem>>, vector<1x128xf32>
    %4 = vector.broadcast %3 : vector<1x128xf32> to vector<16x128xf32>
    %5 = arith.addf %2, %4 : vector<16x128xf32>
    %cst_5 = arith.constant 5.000000e-01 : f32
    %6 = vector.broadcast %cst_5 : f32 to vector<16x128xf32>
    %7 = arith.mulf %6, %5 : vector<16x128xf32>
    %cst_6 = arith.constant 0.707106769 : f32
    %8 = vector.broadcast %cst_6 : f32 to vector<16x128xf32>
    %9 = arith.mulf %5, %8 : vector<16x128xf32>
    %10 = math.erf %9 : vector<16x128xf32>
    %cst_7 = arith.constant 1.000000e+00 : f32
    %11 = vector.broadcast %cst_7 : f32 to vector<16x128xf32>
    %12 = arith.addf %11, %10 : vector<16x128xf32>
    %13 = arith.mulf %7, %12 : vector<16x128xf32>
    %c0_8 = arith.constant 0 : index
    %c0_9 = arith.constant 0 : index
    %14 = vector.load %arg4[%c0_8, %c0_9] : memref<128x32xf32, #tpu.memory_space<vmem>>, vector<128x32xf32>
    %cst_10 = arith.constant dense<0.000000e+00> : vector<16x32xf32>
    %15 = tpu.matmul %13, %14, %cst_10 {dimension_numbers = #tpu.dot_dimension_numbers<[1], [0], [0], [1], [0, 0, 1, 1], [], []>} : vector<16x128xf32>, vector<128x32xf32>, vector<16x32xf32> -> vector<16x32xf32>
    %c0_11 = arith.constant 0 : index
    %c0_12 = arith.constant 0 : index
    %16 = vector.load %arg5[%c0_11, %c0_12] : memref<1x32xf32, #tpu.memory_space<vmem>>, vector<1x32xf32>
    %17 = vector.broadcast %16 : vector<1x32xf32> to vector<16x32xf32>
    %18 = arith.addf %15, %17 : vector<16x32xf32>
    %19 = arith.addf %0, %18 : vector<16x32xf32>
    %c0_13 = arith.constant 0 : index
    %c0_14 = arith.constant 0 : index
    %20 = vector.load %arg6[%c0_13, %c0_14] : memref<16x32xf32, #tpu.memory_space<vmem>>, vector<16x32xf32>
    tpu.vector_store %arg6[%c0_13, %c0_14], %19 {strides = array<i32>} : memref<16x32xf32, #tpu.memory_space<vmem>>, vector<16x32xf32>,
    return
  }
  func.func @transform_0(%arg0: i32) -> (i32, i32) {
    %c0_i32 = arith.constant 0 : i32
    %c0_i32_0 = arith.constant 0 : i32
    return %arg0, %c0_i32 : i32, i32
  }
  func.func @transform_1(%arg0: i32) -> (i32, i32) {
    %c0_i32 = arith.constant 0 : i32
    %c0_i32_0 = arith.constant 0 : i32
    %c0_i32_1 = arith.constant 0 : i32
    return %c0_i32, %c0_i32_0 : i32, i32
  }
  func.func @transform_2(%arg0: i32) -> (i32, i32) {
    %c0_i32 = arith.constant 0 : i32
    %c0_i32_0 = arith.constant 0 : i32
    %c0_i32_1 = arith.constant 0 : i32
    return %c0_i32, %c0_i32_0 : i32, i32
  }
  func.func @transform_3(%arg0: i32) -> (i32, i32) {
    %c0_i32 = arith.constant 0 : i32
    %c0_i32_0 = arith.constant 0 : i32
    %c0_i32_1 = arith.constant 0 : i32
    return %c0_i32, %c0_i32_0 : i32, i32
  }
  func.func @transform_4(%arg0: i32) -> (i32, i32) {
    %c0_i32 = arith.constant 0 : i32
    %c0_i32_0 = arith.constant 0 : i32
    %c0_i32_1 = arith.constant 0 : i32
    return %c0_i32, %c0_i32_0 : i32, i32
  }
  func.func @transform_5(%arg0: i32) -> (i32, i32) {
    %c0_i32 = arith.constant 0 : i32
    %c0_i32_0 = arith.constant 0 : i32
    return %arg0, %c0_i32 : i32, i32
  }
}

</mosaic_0001>

<llo_original>
// kernel: adapter_forward.1
$region0: #{adapter_forward.1}
  #allocation0 [shape = 'u32[]', space=smem, size = 0x4, offset = 0x4, fixed_abs, tag = 'smem constant byte address 0x4 - core index']
  #allocation1 [shape = 'u32[144,128]{1,0:T(1,128)}', space=vmem, size = 0x12000, scoped, tag = 'internal scratch']
  %s0 = inlined_call_operand.vmem [shape: f32[16,32], index: 0, kind: input, shape index: {}]
  %s1 = inlined_call_operand.vmem [shape: f32[32,128], index: 1, kind: input, shape index: {}]
  %s2 = inlined_call_operand.vmem [shape: f32[1,128], index: 2, kind: input, shape index: {}]
  %s3 = inlined_call_operand.vmem [shape: f32[128,32], index: 3, kind: input, shape index: {}]
  %s4 = inlined_call_operand.vmem [shape: f32[1,32], index: 4, kind: input, shape index: {}]
  %s5 = inlined_call_operand.hbm [shape: f32[16,32], index: 5, kind: output, shape index: {}]
  %s6 = sld [smem:[#allocation0]]
  $region30: #{adapter_forward.1} parent=0
    _
  %s8 = ssub.s32 1, %s6
  %s9 = scalar_select 0, %s8, %s6
  $region1: #{adapter_forward.1} parent=0
    #allocation2 [shape = 'u8[8192]{0}', space=vmem, size = 0x2000, scoped, tag = 'output window, operand 0, single buffered']
    #allocation3 [shape = 's32[1]{0}', space=sflag, size = 0x4, scoped, tag = 'scoped memory for adapter_forward.1']
    %10 = vsyncpa [#allocation3], 0
    // Predicated region
    $region2: #{adapter_forward.1} parent=1 // pred_check
      _
    $region3: #{adapter_forward.1} parent=1 // pred_check_branch
      %12 = sbr.rel (0) target = $region5
    $region4: #{adapter_forward.1} parent=1 // pred_region
      _
    $region5: #{adapter_forward.1} parent=1 // pred_fallthru
      _
    // Predicated region
    $region6: #{adapter_forward.1} parent=1 // pred_check
      _
    $region7: #{adapter_forward.1} parent=1 // pred_check_branch
      %14 = sbr.rel (0) target = $region9
    $region8: #{adapter_forward.1} parent=1 // pred_region
      _
    $region9: #{adapter_forward.1} parent=1 // pred_fallthru
      _
    // Predicated region
    $region10: #{adapter_forward.1} parent=1 // pred_check
      _
    $region11: #{adapter_forward.1} parent=1 // pred_check_branch
      %16 = sbr.rel (0) target = $region13
    $region12: #{adapter_forward.1} parent=1 // pred_region
      _
    $region13: #{adapter_forward.1} parent=1 // pred_fallthru
      _
    // Predicated region
    $region14: #{adapter_forward.1} parent=1 // pred_check
      _
    $region15: #{adapter_forward.1} parent=1 // pred_check_branch
      %18 = sbr.rel (0) target = $region17
    $region16: #{adapter_forward.1} parent=1 // pred_region
      _
    $region17: #{adapter_forward.1} parent=1 // pred_fallthru
      _
    // Predicated region
    $region18: #{adapter_forward.1} parent=1 // pred_check
      _
    $region19: #{adapter_forward.1} parent=1 // pred_check_branch
      %20 = sbr.rel (0) target = $region21
    $region20: #{adapter_forward.1} parent=1 // pred_region
      _
    $region21: #{adapter_forward.1} parent=1 // pred_fallthru
      _
    %v21 = vld [vmem:[%s0] sm:$0xff]
    %v22 = vld [vmem:[%s0 + $0x8] sm:$0xff]
    %v23 = vld [vmem:[%s1] sm:$0xff]
    %v24 = vld [vmem:[%s1 + $0x8] sm:$0xff]
    %v25 = vld [vmem:[%s1 + $0x10] sm:$0xff]
    %v26 = vld [vmem:[%s1 + $0x18] sm:$0xff]
    %v27 = vld [vmem:[%s2] sm:$0x1]
    %v29 = vlaneseq
    %v30 = vshrl.u32 %v29, 7
    %v31 = vsub.s32 0, %v30
    %v32 = vrot.slane %v27, %v31
    %vm34 = vcmask 261120
    %v36 = vsel %vm34, %v21, 0
    %v39 = vsel %vm34, %v22, 0
    %41 = vmatprep.subr.mxu0 0.0
    %42 = vmatpush1.msra.mxu0 %v23
    %43 = vmatprep.subr.mxu0 0.0
    %44 = vmatpush1.msra.mxu0 %v24
    %45 = vmatprep.subr.mxu0 0.0
    %46 = vmatpush1.msra.mxu0 %v25
    %47 = vmatprep.subr.mxu0 0.0
    %48 = vmatpush1.msra.mxu0 %v26
    %49 = vmatprep.subr.mxu0 0.0
    %50 = vmatpush1.msra.mxu0 0.0
    %51 = vmatprep.subr.mxu0 0.0
    %52 = vmatpush1.msra.mxu0 0.0
    %53 = vmatprep.subr.mxu0 0.0
    %54 = vmatpush1.msra.mxu0 0.0
    %55 = vmatprep.subr.mxu0 0.0
    %56 = vmatpush1.msra.mxu0 0.0
    %57 = vmatprep.subr.mxu0 0.0
    %58 = vmatpush1.msra.mxu0 0.0
    %59 = vmatprep.subr.mxu0 0.0
    %60 = vmatpush1.msra.mxu0 0.0
    %61 = vmatprep.subr.mxu0 0.0
    %62 = vmatpush1.msra.mxu0 0.0
    %63 = vmatprep.subr.mxu0 0.0
    %64 = vmatpush1.msra.mxu0 0.0
    %65 = vmatprep.subr.mxu0 0.0
    %66 = vmatpush1.msra.mxu0 0.0
    %67 = vmatprep.subr.mxu0 0.0
    %68 = vmatpush1.msra.mxu0 0.0
    %69 = vmatprep.subr.mxu0 0.0
    %70 = vmatpush1.msra.mxu0 0.0
    %71 = vmatprep.subr.mxu0 0.0
    %72 = vmatpush1.msra.mxu0 0.0
    %73 = vmatprep.subr.mxu0 0.0
    %74 = vmatpush1.msra.mxu0 0.0
    %75 = vmatprep.subr.mxu0 0.0
    %76 = vmatpush1.msra.mxu0 0.0
    %77 = vmatprep.subr.mxu0 0.0
    %78 = vmatpush1.msra.mxu0 0.0
    %79 = vmatprep.subr.mxu0 0.0
    %80 = vmatpush1.msra.mxu0 0.0
    %81 = vmatprep.subr.mxu0 0.0
    %82 = vmatpush1.msra.mxu0 0.0
    %83 = vmatprep.subr.mxu0 0.0
    %84 = vmatpush1.msra.mxu0 0.0
    %85 = vmatprep.subr.mxu0 0.0
    %86 = vmatpush1.msra.mxu0 0.0
    %87 = vmatprep.subr.mxu0 0.0
    %88 = vmatpush1.msra.mxu0 0.0
    %89 = vmatprep.subr.mxu0 0.0
    %90 = vmatpush1.msra.mxu0 0.0
    %91 = vmatprep.subr.mxu0 0.0
    %92 = vmatpush1.msra.mxu0 0.0
    %93 = vmatprep.subr.mxu0 0.0
    %94 = vmatpush1.msra.mxu0 0.0
    %95 = vmatprep.subr.mxu0 0.0
    %96 = vmatpush1.msra.mxu0 0.0
    %97 = vmatprep.subr.mxu0 0.0
    %98 = vmatpush1.msra.mxu0 0.0
    %99 = vmatprep.subr.mxu0 0.0
    %100 = vmatpush1.msra.mxu0 0.0
    %101 = vmatprep.subr.mxu0 0.0
    %102 = vmatpush1.msra.mxu0 0.0
    %103 = vmatprep.subr.mxu0 0.0
    %104 = vmatpush1.msra.mxu0 0.0
    %105 = vmatprep.mubr.f32.mxu0 0.0
    %106 = vmatmul.mubr.f32.gmra.mrb[0].mxu0 %v36
    %v107 = vpop.f32.mrb[0].mxu0
    %v108 = vadd.f32 %v32, %v107
    %v109 = vpop.f32.mrb[0].mxu0
    %110 = vmatprep.mubr.f32.mxu0 0.0
    %111 = vmatmul.mubr.f32.gmra.mrb[0].mxu0 %v39
    %v112 = vpop.f32.mrb[0].mxu0
    %v113 = vadd.f32 %v32, %v112
    %v114 = vpop.f32.mrb[0].mxu0
    %115 = vdwg.mxu0
    %v116 = vmul.f32 %v108, 0.5
    %v117 = vmul.f32 %v113, 0.5
    %v118 = vmul.f32 %v108, 0.70710677
    %v119 = vmul.f32 %v113, 0.70710677
    %v120 = verf.f32.pop %v118
    %v121 = verf.f32.pop %v119
    %v122 = vadd.f32 %v120, 1.0
    %v123 = vadd.f32 %v121, 1.0
    %v124 = vmul.f32 %v116, %v122
    %v125 = vmul.f32 %v117, %v123
    %v126 = vld [vmem:[%s3] sm:$0xff]
    %v127 = vld [vmem:[%s3 + $0x8] sm:$0xff]
    %v128 = vld [vmem:[%s3 + $0x10] sm:$0xff]
    %v129 = vld [vmem:[%s3 + $0x18] sm:$0xff]
    %v130 = vld [vmem:[%s3 + $0x20] sm:$0xff]
    %v131 = vld [vmem:[%s3 + $0x28] sm:$0xff]
    %v132 = vld [vmem:[%s3 + $0x30] sm:$0xff]
    %v133 = vld [vmem:[%s3 + $0x38] sm:$0xff]
    %v134 = vld [vmem:[%s3 + $0x40] sm:$0xff]
    %v135 = vld [vmem:[%s3 + $0x48] sm:$0xff]
    %v136 = vld [vmem:[%s3 + $0x50] sm:$0xff]
    %v137 = vld [vmem:[%s3 + $0x58] sm:$0xff]
    %v138 = vld [vmem:[%s3 + $0x60] sm:$0xff]
    %v139 = vld [vmem:[%s3 + $0x68] sm:$0xff]
    %v140 = vld [vmem:[%s3 + $0x70] sm:$0xff]
    %v141 = vld [vmem:[%s3 + $0x78] sm:$0xff]
    %v142 = vld [vmem:[%s4] sm:$0x1]
    %v144 = vlaneseq
    %v145 = vshrl.u32 %v144, 7
    %v146 = vsub.s32 0, %v145
    %v147 = vrot.slane %v142, %v146
    %149 = vmatprep.subr.mxu0 0.0
    %150 = vmatpush1.msra.mxu0 %v126
    %151 = vmatprep.subr.mxu0 0.0
    %152 = vmatpush1.msra.mxu0 %v127
    %153 = vmatprep.subr.mxu0 0.0
    %154 = vmatpush1.msra.mxu0 %v128
    %155 = vmatprep.subr.mxu0 0.0
    %156 = vmatpush1.msra.mxu0 %v129
    %157 = vmatprep.subr.mxu0 0.0
    %158 = vmatpush1.msra.mxu0 %v130
    %159 = vmatprep.subr.mxu0 0.0
    %160 = vmatpush1.msra.mxu0 %v131
    %161 = vmatprep.subr.mxu0 0.0
    %162 = vmatpush1.msra.mxu0 %v132
    %163 = vmatprep.subr.mxu0 0.0
    %164 = vmatpush1.msra.mxu0 %v133
    %165 = vmatprep.subr.mxu0 0.0
    %166 = vmatpush1.msra.mxu0 %v134
    %167 = vmatprep.subr.mxu0 0.0
    %168 = vmatpush1.msra.mxu0 %v135
    %169 = vmatprep.subr.mxu0 0.0
    %170 = vmatpush1.msra.mxu0 %v136
    %171 = vmatprep.subr.mxu0 0.0
    %172 = vmatpush1.msra.mxu0 %v137
    %173 = vmatprep.subr.mxu0 0.0
    %174 = vmatpush1.msra.mxu0 %v138
    %175 = vmatprep.subr.mxu0 0.0
    %176 = vmatpush1.msra.mxu0 %v139
    %177 = vmatprep.subr.mxu0 0.0
    %178 = vmatpush1.msra.mxu0 %v140
    %179 = vmatprep.subr.mxu0 0.0
    %180 = vmatpush1.msra.mxu0 %v141
    %181 = vmatprep.subr.mxu0 0.0
    %182 = vmatpush1.msra.mxu0 0.0
    %183 = vmatprep.subr.mxu0 0.0
    %184 = vmatpush1.msra.mxu0 0.0
    %185 = vmatprep.subr.mxu0 0.0
    %186 = vmatpush1.msra.mxu0 0.0
    %187 = vmatprep.subr.mxu0 0.0
    %188 = vmatpush1.msra.mxu0 0.0
    %189 = vmatprep.subr.mxu0 0.0
    %190 = vmatpush1.msra.mxu0 0.0
    %191 = vmatprep.subr.mxu0 0.0
    %192 = vmatpush1.msra.mxu0 0.0
    %193 = vmatprep.subr.mxu0 0.0
    %194 = vmatpush1.msra.mxu0 0.0
    %195 = vmatprep.subr.mxu0 0.0
    %196 = vmatpush1.msra.mxu0 0.0
    %197 = vmatprep.subr.mxu0 0.0
    %198 = vmatpush1.msra.mxu0 0.0
    %199 = vmatprep.subr.mxu0 0.0
    %200 = vmatpush1.msra.mxu0 0.0
    %201 = vmatprep.subr.mxu0 0.0
    %202 = vmatpush1.msra.mxu0 0.0
    %203 = vmatprep.subr.mxu0 0.0
    %204 = vmatpush1.msra.mxu0 0.0
    %205 = vmatprep.subr.mxu0 0.0
    %206 = vmatpush1.msra.mxu0 0.0
    %207 = vmatprep.subr.mxu0 0.0
    %208 = vmatpush1.msra.mxu0 0.0
    %209 = vmatprep.subr.mxu0 0.0
    %210 = vmatpush1.msra.mxu0 0.0
    %211 = vmatprep.subr.mxu0 0.0
    %212 = vmatpush1.msra.mxu0 0.0
    %213 = vmatprep.mubr.f32.mxu0 0.0
    %214 = vmatmul.mubr.f32.gmra.mrb[0].mxu0 %v124
    %v215 = vpop.f32.mrb[0].mxu0
    %v216 = vadd.f32 %v147, %v215
    %v217 = vpop.f32.mrb[0].mxu0
    %218 = vmatprep.mubr.f32.mxu0 0.0
    %219 = vmatmul.mubr.f32.gmra.mrb[0].mxu0 %v125
    %v220 = vpop.f32.mrb[0].mxu0
    %v221 = vadd.f32 %v147, %v220
    %v222 = vpop.f32.mrb[0].mxu0
    %223 = vdwg.mxu0
    %v224 = vadd.f32 %v21, %v216
    %v225 = vadd.f32 %v22, %v221
    %226 = vst.msk [vmem:[#allocation2] sm:$0xff] %vm34, %v224
    %227 = vst.msk [vmem:[#allocation2 + $0x8] sm:$0xff] %vm34, %v225
    // Predicated region
    $region22: #{adapter_forward.1} parent=1 // pred_check
      _
    $region23: #{adapter_forward.1} parent=1 // pred_check_branch
      %229 = sbr.rel (0) target = $region25
    $region24: #{adapter_forward.1} parent=1 // pred_region
      %s231 = ssub.s32 256, 256
      %232 = vsyncadd [#allocation3], %s231
      %s233 = sshll.u32 [#allocation2], 4
      %s234 = int_to_ptr.vmem [resolvable:$true] %s233
      %239 = dma.vmem_to_hbm [thread:$0]  %s234, 256, %s5, [#allocation3], 128, 128, 8
    $region25: #{adapter_forward.1} parent=1 // pred_fallthru
      _
    // Predicated region
    $region26: #{adapter_forward.1} parent=1 // pred_check
      _
    $region27: #{adapter_forward.1} parent=1 // pred_check_branch
      %241 = sbr.rel (0) target = $region29
    $region28: #{adapter_forward.1} parent=1 // pred_region
      %242 = dma.done [#allocation3], 256
    $region29: #{adapter_forward.1} parent=1 // pred_fallthru
      _
    %243 = vsyncpa [#allocation3], 1

</llo_original>
